<compile_context>
chip_gen: v5e
topology: v5e:2x2
jax: 0.10.0
libtpu: 0.0.40
codegen_flags: <defaults>
</compile_context>

<pallas_src>
from functools import partial

import jax
import jax.numpy as jnp
from jax.experimental import pallas as pl
from jax.experimental.pallas import tpu as pltpu

GAIN_PHI = 1.0
GAIN_PSI = 1.0
OFFSET_PHI = 0.0
OFFSET_PSI = 0.0


def _round_up(n: int, m: int) -> int:
    return ((n + m - 1) // m) * m


def _build_model_kernel(params_ref, x_ref, ut_ref, wt_ref, k_ref, y_ref, z_ref):
    # SMEM scalar parameters: [gain_psi, offset_psi, gain_phi, offset_phi]
    gain_psi = params_ref[0]
    offset_psi = params_ref[1]
    gain_phi = params_ref[2]
    offset_phi = params_ref[3]

    # k = x @ U^T. Ut is already transposed ([N1, N2]) in the wrapper, so this
    # is a plain ((1,),(0,)) contraction -> no per-step transpose of the
    # VMEM-resident weight tile.
    k = jnp.dot(x_ref[...], ut_ref[...], preferred_element_type=jnp.float32)
    k_ref[...] = k.astype(k_ref.dtype)

    # y = sigmoid(gain_psi * (k - offset_psi))   (VPU/EUP, f32)
    y = jax.nn.sigmoid(gain_psi * (k - offset_psi))
    y_ref[...] = y.astype(y_ref.dtype)

    # h = y @ W^T  (Wt is [N2, N3])
    h = jnp.dot(y.astype(wt_ref.dtype), wt_ref[...],
                preferred_element_type=jnp.float32)

    # z = sigmoid(gain_phi * (h - offset_phi))
    z = jax.nn.sigmoid(gain_phi * (h - offset_phi))
    z_ref[...] = z.astype(z_ref.dtype)


@partial(jax.jit, static_argnames=("block_b", "use_bf16"))
def build_model_forward(
    x, U, W,
    gain_psi=GAIN_PSI, offset_psi=OFFSET_PSI,
    gain_phi=GAIN_PHI, offset_phi=OFFSET_PHI,
    *,
    block_b=2048,
    use_bf16=False,
):
    """x: [B, N1]; U: [N2, N1]; W: [N3, N2] (PyTorch nn.Linear weight layout).

    Returns (k, y, z) with shapes [B, N2], [B, N2], [B, N3] in float32.
    """
    B, N1 = x.shape
    N2, n1u = U.shape
    N3, n2w = W.shape
    assert n1u == N1 and n2w == N2

    # Batch tile: multiple of 8 sublanes; only the batch dim is padded (rows).
    bb = _round_up(min(block_b, _round_up(B, 8)), 8)
    Bp = _round_up(B, bb)

    in_dtype = jnp.bfloat16 if use_bf16 else jnp.float32

    xp = x.astype(jnp.float32)
    if Bp != B:
        xp = jnp.pad(xp, ((0, Bp - B), (0, 0)))
    xp = xp.astype(in_dtype)

    # One-time weight transpose (tiny; fused/constant-folded under jit).
    Ut = jnp.transpose(U.astype(jnp.float32)).astype(in_dtype)  # [N1, N2]
    Wt = jnp.transpose(W.astype(jnp.float32)).astype(in_dtype)  # [N2, N3]

    params = jnp.array([gain_psi, offset_psi, gain_phi, offset_phi],
                       dtype=jnp.float32)

    grid = (Bp // bb,)

    out_shapes = (
        jax.ShapeDtypeStruct((Bp, N2), jnp.float32),  # k
        jax.ShapeDtypeStruct((Bp, N2), jnp.float32),  # y
        jax.ShapeDtypeStruct((Bp, N3), jnp.float32),  # z
    )

    kp, yp, zp = pl.pallas_call(
        _build_model_kernel,
        out_shape=out_shapes,
        grid=grid,
        in_specs=[
            # gains/offsets live in SMEM, read as scalars inside the kernel.
            pl.BlockSpec(memory_space=pltpu.MemorySpace.SMEM),
            # x: tiled along the batch axis; last dim = full array dim (legal).
            pl.BlockSpec((bb, N1), lambda i: (i, 0)),
            # weights: constant block index -> stay resident in VMEM.
            pl.BlockSpec((N1, N2), lambda i: (0, 0)),
            pl.BlockSpec((N2, N3), lambda i: (0, 0)),
        ],
        out_specs=(
            pl.BlockSpec((bb, N2), lambda i: (i, 0)),
            pl.BlockSpec((bb, N2), lambda i: (i, 0)),
            pl.BlockSpec((bb, N3), lambda i: (i, 0)),
        ),
        compiler_params=pltpu.CompilerParams(
            dimension_semantics=("parallel",),
        ),
    )(params, xp, Ut, Wt)

    if Bp != B:
        kp, yp, zp = kp[:B], yp[:B], zp[:B]
    return kp, yp, zp


def reference_forward(x, U, W):
    k = x @ U.T
    y = jax.nn.sigmoid(GAIN_PSI * (k - OFFSET_PSI))
    h = y @ W.T
    z = jax.nn.sigmoid(GAIN_PHI * (h - OFFSET_PHI))
    return k, y, z


if __name__ == "__main__":
    # Small shapes consistent with the module: N1=16, N2=32, N3=8, batch=4
    N1, N2, N3 = 16, 32, 8
    B = 4

    key = jax.random.PRNGKey(0)
    kx, ku, kw = jax.random.split(key, 3)

    x = jax.random.normal(kx, (B, N1), dtype=jnp.float32)

    # Deterministic init matching nn.Linear's uniform(-1/sqrt(fan_in), ...)
    bound_u = 1.0 / float(jnp.sqrt(jnp.float32(N1)))
    bound_w = 1.0 / float(jnp.sqrt(jnp.float32(N2)))
    U = jax.random.uniform(ku, (N2, N1), minval=-bound_u, maxval=bound_u,
                           dtype=jnp.float32)
    W = jax.random.uniform(kw, (N3, N2), minval=-bound_w, maxval=bound_w,
                           dtype=jnp.float32)

    k_out, y_out, z_out = build_model_forward(x, U, W)
    jax.block_until_ready((k_out, y_out, z_out))

    k_ref, y_ref, z_ref = reference_forward(x, U, W)
    assert k_out.shape == (B, N2) and y_out.shape == (B, N2) and z_out.shape == (B, N3)
    assert jnp.allclose(k_out, k_ref, atol=1e-5, rtol=1e-5)
    assert jnp.allclose(y_out, y_ref, atol=1e-5, rtol=1e-5)
    assert jnp.allclose(z_out, z_ref, atol=1e-5, rtol=1e-5)

    print("KERNEL_OK")
</pallas_src>

<mosaic_0001>
module attributes {stable_mosaic.version = 11 : i64} {
  func.func @_build_model_kernel(%arg0: i32, %arg1: memref<4xf32, #tpu.memory_space<smem>>, %arg2: memref<8x16xf32, #tpu.memory_space<vmem>>, %arg3: memref<16x32xf32, #tpu.memory_space<vmem>>, %arg4: memref<32x8xf32, #tpu.memory_space<vmem>>, %arg5: memref<8x32xf32, #tpu.memory_space<vmem>>, %arg6: memref<8x32xf32, #tpu.memory_space<vmem>>, %arg7: memref<8x8xf32, #tpu.memory_space<vmem>>) attributes {dimension_semantics = [#tpu.dimension_semantics<parallel>], iteration_bounds = array<i64: 1>, scalar_prefetch = 0 : i64, scratch_operands = 0 : i64, tpu.core_type = #tpu.core_type<tc>, window_params = [{transform_indices = @transform_0, window_bounds = array<i64: 4>}, {transform_indices = @transform_1, window_bounds = array<i64: 8, 16>}, {pipeline_mode = #tpu.pipeline_mode<synchronous>, transform_indices = @transform_2, window_bounds = array<i64: 16, 32>}, {pipeline_mode = #tpu.pipeline_mode<synchronous>, transform_indices = @transform_3, window_bounds = array<i64: 32, 8>}, {transform_indices = @transform_4, window_bounds = array<i64: 8, 32>}, {transform_indices = @transform_5, window_bounds = array<i64: 8, 32>}, {transform_indices = @transform_6, window_bounds = array<i64: 8, 8>}]} {
    %c0 = arith.constant 0 : index
    %0 = memref.load %arg1[%c0] : memref<4xf32, #tpu.memory_space<smem>>
    %c1 = arith.constant 1 : index
    %1 = memref.load %arg1[%c1] : memref<4xf32, #tpu.memory_space<smem>>
    %c2 = arith.constant 2 : index
    %2 = memref.load %arg1[%c2] : memref<4xf32, #tpu.memory_space<smem>>
    %c3 = arith.constant 3 : index
    %3 = memref.load %arg1[%c3] : memref<4xf32, #tpu.memory_space<smem>>
    %c0_0 = arith.constant 0 : index
    %c0_1 = arith.constant 0 : index
    %4 = vector.load %arg2[%c0_0, %c0_1] : memref<8x16xf32, #tpu.memory_space<vmem>>, vector<8x16xf32>
    %c0_2 = arith.constant 0 : index
    %c0_3 = arith.constant 0 : index
    %5 = vector.load %arg3[%c0_2, %c0_3] : memref<16x32xf32, #tpu.memory_space<vmem>>, vector<16x32xf32>
    %cst = arith.constant dense<0.000000e+00> : vector<8x32xf32>
    %6 = tpu.matmul %4, %5, %cst {dimension_numbers = #tpu.dot_dimension_numbers<[1], [0], [0], [1], [0, 0, 1, 1], [], []>} : vector<8x16xf32>, vector<16x32xf32>, vector<8x32xf32> -> vector<8x32xf32>
    %c0_4 = arith.constant 0 : index
    %c0_5 = arith.constant 0 : index
    %7 = vector.load %arg5[%c0_4, %c0_5] : memref<8x32xf32, #tpu.memory_space<vmem>>, vector<8x32xf32>
    tpu.vector_store %arg5[%c0_4, %c0_5], %6 {strides = array<i32>} : memref<8x32xf32, #tpu.memory_space<vmem>>, vector<8x32xf32>,
    %8 = vector.broadcast %1 : f32 to vector<8x32xf32>
    %9 = arith.subf %6, %8 : vector<8x32xf32>
    %10 = vector.broadcast %0 : f32 to vector<8x32xf32>
    %11 = arith.mulf %10, %9 : vector<8x32xf32>
    %12 = arith.negf %11 : vector<8x32xf32>
    %13 = math.exp %12 : vector<8x32xf32>
    %cst_6 = arith.constant 1.000000e+00 : f32
    %14 = vector.broadcast %cst_6 : f32 to vector<8x32xf32>
    %15 = arith.addf %14, %13 : vector<8x32xf32>
    %16 = arith.divf %14, %15 : vector<8x32xf32>
    %c0_7 = arith.constant 0 : index
    %c0_8 = arith.constant 0 : index
    %17 = vector.load %arg6[%c0_7, %c0_8] : memref<8x32xf32, #tpu.memory_space<vmem>>, vector<8x32xf32>
    tpu.vector_store %arg6[%c0_7, %c0_8], %16 {strides = array<i32>} : memref<8x32xf32, #tpu.memory_space<vmem>>, vector<8x32xf32>,
    %c0_9 = arith.constant 0 : index
    %c0_10 = arith.constant 0 : index
    %18 = vector.load %arg4[%c0_9, %c0_10] : memref<32x8xf32, #tpu.memory_space<vmem>>, vector<32x8xf32>
    %cst_11 = arith.constant dense<0.000000e+00> : vector<8x8xf32>
    %19 = tpu.matmul %16, %18, %cst_11 {dimension_numbers = #tpu.dot_dimension_numbers<[1], [0], [0], [1], [0, 0, 1, 1], [], []>} : vector<8x32xf32>, vector<32x8xf32>, vector<8x8xf32> -> vector<8x8xf32>
    %20 = vector.broadcast %3 : f32 to vector<8x8xf32>
    %21 = arith.subf %19, %20 : vector<8x8xf32>
    %22 = vector.broadcast %2 : f32 to vector<8x8xf32>
    %23 = arith.mulf %22, %21 : vector<8x8xf32>
    %24 = arith.negf %23 : vector<8x8xf32>
    %25 = math.exp %24 : vector<8x8xf32>
    %cst_12 = arith.constant 1.000000e+00 : f32
    %26 = vector.broadcast %cst_12 : f32 to vector<8x8xf32>
    %27 = arith.addf %26, %25 : vector<8x8xf32>
    %28 = arith.divf %26, %27 : vector<8x8xf32>
    %c0_13 = arith.constant 0 : index
    %c0_14 = arith.constant 0 : index
    %29 = vector.load %arg7[%c0_13, %c0_14] : memref<8x8xf32, #tpu.memory_space<vmem>>, vector<8x8xf32>
    tpu.vector_store %arg7[%c0_13, %c0_14], %28 {strides = array<i32>} : memref<8x8xf32, #tpu.memory_space<vmem>>, vector<8x8xf32>,
    return
  }
  func.func @transform_0(%arg0: i32) -> i32 {
    %c0_i32 = arith.constant 0 : i32
    %c0_i32_0 = arith.constant 0 : i32
    return %c0_i32 : i32
  }
  func.func @transform_1(%arg0: i32) -> (i32, i32) {
    %c0_i32 = arith.constant 0 : i32
    %c0_i32_0 = arith.constant 0 : i32
    return %arg0, %c0_i32 : i32, i32
  }
  func.func @transform_2(%arg0: i32) -> (i32, i32) {
    %c0_i32 = arith.constant 0 : i32
    %c0_i32_0 = arith.constant 0 : i32
    %c0_i32_1 = arith.constant 0 : i32
    return %c0_i32, %c0_i32_0 : i32, i32
  }
  func.func @transform_3(%arg0: i32) -> (i32, i32) {
    %c0_i32 = arith.constant 0 : i32
    %c0_i32_0 = arith.constant 0 : i32
    %c0_i32_1 = arith.constant 0 : i32
    return %c0_i32, %c0_i32_0 : i32, i32
  }
  func.func @transform_4(%arg0: i32) -> (i32, i32) {
    %c0_i32 = arith.constant 0 : i32
    %c0_i32_0 = arith.constant 0 : i32
    return %arg0, %c0_i32 : i32, i32
  }
  func.func @transform_5(%arg0: i32) -> (i32, i32) {
    %c0_i32 = arith.constant 0 : i32
    %c0_i32_0 = arith.constant 0 : i32
    return %arg0, %c0_i32 : i32, i32
  }
  func.func @transform_6(%arg0: i32) -> (i32, i32) {
    %c0_i32 = arith.constant 0 : i32
    %c0_i32_0 = arith.constant 0 : i32
    return %arg0, %c0_i32 : i32, i32
  }
}

</mosaic_0001>

<llo_original>
// kernel: build_model_forward.1
$region0: #{build_model_forward.1}
  #allocation0 [shape = 'u32[]', space=smem, size = 0x4, offset = 0x4, fixed_abs, tag = 'smem constant byte address 0x4 - core index']
  #allocation1 [shape = 'u32[72,128]{1,0:T(1,128)}', space=vmem, size = 0x9000, scoped, tag = 'internal scratch']
  %s0 = inlined_call_operand.vmem [shape: f32[4], index: 0, kind: input, shape index: {}]
  %s1 = inlined_call_operand.vmem [shape: f32[8,16], index: 1, kind: input, shape index: {}]
  %s2 = inlined_call_operand.vmem [shape: f32[16,32], index: 2, kind: input, shape index: {}]
  %s3 = inlined_call_operand.vmem [shape: f32[32,8], index: 3, kind: input, shape index: {}]
  %s4 = inlined_call_operand.vmem [shape: f32[8,32], index: 4, kind: output, shape index: {0}]
  %s5 = inlined_call_operand.vmem [shape: f32[8,32], index: 5, kind: output, shape index: {1}]
  %s6 = inlined_call_operand.vmem [shape: f32[8,8], index: 6, kind: output, shape index: {2}]
  %7 = xla_tuple %s4, %s5, %s6
  %s8 = sld [smem:[#allocation0]]
  $region46: #{build_model_forward.1} parent=0
    _
  %s10 = ssub.s32 1, %s8
  %s11 = scalar_select 0, %s10, %s8
  $region1: #{build_model_forward.1} parent=0
    #allocation2 [shape = 'u8[512]{0}', space=smem, size = 0x200, scoped, tag = 'input window, operand 0, single buffered']
    #allocation3 [shape = 's32[1]{0}', space=sflag, size = 0x4, scoped, tag = 'scoped memory for build_model_forward.1']
    %12 = vsyncpa [#allocation3], 0
    // Predicated region
    $region2: #{build_model_forward.1} parent=1 // pred_check
      _
    $region3: #{build_model_forward.1} parent=1 // pred_check_branch
      %14 = sbr.rel (0) target = $region5
    $region4: #{build_model_forward.1} parent=1 // pred_region
      %16 = vsyncadd [#allocation3], 0
      %s18 = sshll.u32 %s0, 4
      %s19 = int_to_ptr.vmem [resolvable:$true] %s18
      %21 = dma.vmem_to_smem %s19, 16, [#allocation2], [#allocation3]
    $region5: #{build_model_forward.1} parent=1 // pred_fallthru
      _
    // Predicated region
    $region6: #{build_model_forward.1} parent=1 // pred_check
      _
    $region7: #{build_model_forward.1} parent=1 // pred_check_branch
      %23 = sbr.rel (0) target = $region9
    $region8: #{build_model_forward.1} parent=1 // pred_region
      _
    $region9: #{build_model_forward.1} parent=1 // pred_fallthru
      _
    // Predicated region
    $region10: #{build_model_forward.1} parent=1 // pred_check
      _
    $region11: #{build_model_forward.1} parent=1 // pred_check_branch
      %25 = sbr.rel (0) target = $region13
    $region12: #{build_model_forward.1} parent=1 // pred_region
      _
    $region13: #{build_model_forward.1} parent=1 // pred_fallthru
      _
    // Predicated region
    $region14: #{build_model_forward.1} parent=1 // pred_check
      _
    $region15: #{build_model_forward.1} parent=1 // pred_check_branch
      %27 = sbr.rel (0) target = $region17
    $region16: #{build_model_forward.1} parent=1 // pred_region
      _
    $region17: #{build_model_forward.1} parent=1 // pred_fallthru
      _
    // Predicated region
    $region18: #{build_model_forward.1} parent=1 // pred_check
      _
    $region19: #{build_model_forward.1} parent=1 // pred_check_branch
      %29 = sbr.rel (0) target = $region21
    $region20: #{build_model_forward.1} parent=1 // pred_region
      %31 = dma.done [#allocation3], 16
    $region21: #{build_model_forward.1} parent=1 // pred_fallthru
      _
    %32 = sfence
    %s33 = sld [smem:[#allocation2]]
    %s34 = sld [smem:[#allocation2 + $0x1]]
    %s35 = sld [smem:[#allocation2 + $0x2]]
    %s36 = sld [smem:[#allocation2 + $0x3]]
    %v37 = vld [vmem:[%s1] sm:$0xff]
    %v38 = vld [vmem:[%s2] sm:$0xff]
    %v39 = vld [vmem:[%s2 + $0x8] sm:$0xff]
    %vm40 = vcmask 130048
    %v42 = vsel %vm40, %v37, 0
    %44 = vmatpush.msra.mxu0 0.0
    %45 = vmatpush.msra.mxu0 0.0
    %46 = vmatpush.msra.mxu0 0.0
    %47 = vmatpush.msra.mxu0 0.0
    %48 = vmatpush.msra.mxu0 0.0
    %49 = vmatpush.msra.mxu0 0.0
    %50 = vmatpush.msra.mxu0 0.0
    %51 = vmatpush.msra.mxu0 0.0
    %52 = vmatpush.msra.mxu0 0.0
    %53 = vmatpush.msra.mxu0 0.0
    %54 = vmatpush.msra.mxu0 0.0
    %55 = vmatpush.msra.mxu0 0.0
    %56 = vmatpush.msra.mxu0 0.0
    %57 = vmatpush.msra.mxu0 0.0
    %58 = vmatpush.msra.mxu0 %v39
    %59 = vmatpush.msra.mxu0 %v38
    %60 = vmatmul.f32.gmra.mxu0 %v42
    %v61 = vpop.f32.mrf.mxu0
    %v62 = vadd.f32 0.0, %v61
    %63 = vdwg.mxu0
    %vm64 = vcmask 261120
    %65 = vst.msk [vmem:[%s4] sm:$0xff] %vm64, %v62
    %v66 = vstv %s34
    %v67 = vsub.f32 %v62, %v66
    %v68 = vstv %s33
    %v69 = vmul.f32 %v68, %v67
    %v70 = vxor.u32 %v69, 2147483648
    %v71 = vmul.f32 %v70, 1.442695
    %v72 = vpow.pop %v71
    %v73 = vadd.f32 %v72, 1.0
    %v74 = vrcp.pop %v73
    %v75 = vmul.f32 %v73, %v74
    %v76 = vsub.f32 1.0, %v75
    %v77 = vmul.f32 %v74, %v76
    %v78 = vadd.f32 %v74, %v77
    %vm79 = vweird.f32 %v73
    %vm80 = vweird.f32 %v74
    %vm81 = vmor %vm79, %vm80
    %v82 = vsel %vm81, %v74, %v78
    %v83 = vand.u32 2147483647, %v73
    %vm84 = vcmp.eq.f32.partialorder %v83, 8.507059e+37
    %v85 = vand.u32 %v73, 2147483648
    %v86 = vor.u32 1.1754944e-38, %v85
    %v87 = vsel %vm84, %v86, %v82
    %v88 = vmul.f32 1.0, %v87
    %89 = vst.msk [vmem:[%s5] sm:$0xff] %vm64, %v88
    %v90 = vld [vmem:[%s3] sm:$0xff]
    %v91 = vld [vmem:[%s3 + $0x8] sm:$0xff]
    %v92 = vld [vmem:[%s3 + $0x10] sm:$0xff]
    %v93 = vld [vmem:[%s3 + $0x18] sm:$0xff]
    %v95 = vsel %vm64, %v88, 0
    %97 = vmatpush.msra.mxu0 0.0
    %98 = vmatpush.msra.mxu0 0.0
    %99 = vmatpush.msra.mxu0 0.0
    %100 = vmatpush.msra.mxu0 0.0
    %101 = vmatpush.msra.mxu0 0.0
    %102 = vmatpush.msra.mxu0 0.0
    %103 = vmatpush.msra.mxu0 0.0
    %104 = vmatpush.msra.mxu0 0.0
    %105 = vmatpush.msra.mxu0 0.0
    %106 = vmatpush.msra.mxu0 0.0
    %107 = vmatpush.msra.mxu0 0.0
    %108 = vmatpush.msra.mxu0 0.0
    %109 = vmatpush.msra.mxu0 %v93
    %110 = vmatpush.msra.mxu0 %v92
    %111 = vmatpush.msra.mxu0 %v91
    %112 = vmatpush.msra.mxu0 %v90
    %113 = vmatmul.f32.gmra.mxu0 %v95
    %v114 = vpop.f32.mrf.mxu0
    %v115 = vadd.f32 0.0, %v114
    %116 = vdwg.mxu0
    %v117 = vstv %s36
    %v118 = vsub.f32 %v115, %v117
    %v119 = vstv %s35
    %v120 = vmul.f32 %v119, %v118
    %v121 = vxor.u32 %v120, 2147483648
    %v122 = vmul.f32 %v121, 1.442695
    %v123 = vpow.pop %v122
    %v124 = vadd.f32 %v123, 1.0
    %v125 = vrcp.pop %v124
    %v126 = vmul.f32 %v124, %v125
    %v127 = vsub.f32 1.0, %v126
    %v128 = vmul.f32 %v125, %v127
    %v129 = vadd.f32 %v125, %v128
    %vm130 = vweird.f32 %v124
    %vm131 = vweird.f32 %v125
    %vm132 = vmor %vm130, %vm131
    %v133 = vsel %vm132, %v125, %v129
    %v134 = vand.u32 2147483647, %v124
    %vm135 = vcmp.eq.f32.partialorder %v134, 8.507059e+37
    %v136 = vand.u32 %v124, 2147483648
    %v137 = vor.u32 1.1754944e-38, %v136
    %v138 = vsel %vm135, %v137, %v133
    %v139 = vmul.f32 1.0, %v138
    %vm140 = vcmask 64512
    %141 = vst.msk [vmem:[%s6] sm:$0xff] %vm140, %v139
    // Predicated region
    $region22: #{build_model_forward.1} parent=1 // pred_check
      _
    $region23: #{build_model_forward.1} parent=1 // pred_check_branch
      %143 = sbr.rel (0) target = $region25
    $region24: #{build_model_forward.1} parent=1 // pred_region
      _
    $region25: #{build_model_forward.1} parent=1 // pred_fallthru
      _
    // Predicated region
    $region26: #{build_model_forward.1} parent=1 // pred_check
      _
    $region27: #{build_model_forward.1} parent=1 // pred_check_branch
      %145 = sbr.rel (0) target = $region29
    $region28: #{build_model_forward.1} parent=1 // pred_region
      _
    $region29: #{build_model_forward.1} parent=1 // pred_fallthru
      _
    // Predicated region
    $region30: #{build_model_forward.1} parent=1 // pred_check
      _
    $region31: #{build_model_forward.1} parent=1 // pred_check_branch
      %147 = sbr.rel (0) target = $region33
    $region32: #{build_model_forward.1} parent=1 // pred_region
      _
    $region33: #{build_model_forward.1} parent=1 // pred_fallthru
      _
    // Predicated region
    $region34: #{build_model_forward.1} parent=1 // pred_check
      _
    $region35: #{build_model_forward.1} parent=1 // pred_check_branch
      %149 = sbr.rel (0) target = $region37
    $region36: #{build_model_forward.1} parent=1 // pred_region
      _
    $region37: #{build_model_forward.1} parent=1 // pred_fallthru
      _
    // Predicated region
    $region38: #{build_model_forward.1} parent=1 // pred_check
      _
    $region39: #{build_model_forward.1} parent=1 // pred_check_branch
      %151 = sbr.rel (0) target = $region41
    $region40: #{build_model_forward.1} parent=1 // pred_region
      _
    $region41: #{build_model_forward.1} parent=1 // pred_fallthru
      _
    // Predicated region
    $region42: #{build_model_forward.1} parent=1 // pred_check
      _
    $region43: #{build_model_forward.1} parent=1 // pred_check_branch
      %153 = sbr.rel (0) target = $region45
    $region44: #{build_model_forward.1} parent=1 // pred_region
      _
    $region45: #{build_model_forward.1} parent=1 // pred_fallthru
      _
    %154 = vsyncpa [#allocation3], 1

</llo_original>
